<compile_context>
chip_gen: v5e
topology: v5e:2x2
jax: 0.10.0
libtpu: 0.0.40
codegen_flags: <defaults>
</compile_context>

<pallas_src>
import functools

import jax
import jax.numpy as jnp
from jax.experimental import pallas as pl
from jax.experimental.pallas import tpu as pltpu


_SUBLANE = 8              # minimal sublane alignment for the flattened row count
_TILE_ROW_ALIGN = 32      # tiles that are multiples of 32 satisfy f32/bf16/int8 packing
_VMEM_LIMIT = 40 * 1024 * 1024   # <= 40 MiB: safe on v7x (64 MiB phys), ample for 2 MiB tiles


# ---------------------------------------------------------------------------
# Kernels
# ---------------------------------------------------------------------------

def _plif_kernel(tau_ref, dv_ref, v_ref, spike_ref, v_out_ref, *, v_threshold, v_reset):
    """Single-timestep elementwise PLIF update on one (tile_rows, lanes) tile."""
    tau = tau_ref[0, 0]                       # shared scalar tau (SMEM)
    dv = dv_ref[...]
    v = v_ref[...]

    # charge: v += (dv - (v - v_reset)) * tau
    v_new = v + (dv - (v - v_reset)) * tau

    # fire: Heaviside(v - v_threshold) in the forward pass
    fired = v_new >= v_threshold
    spike_ref[...] = fired.astype(spike_ref.dtype)

    # reset: hard voltage transform as a single select reusing the comparison
    v_out_ref[...] = jnp.where(fired, v_reset, v_new)


def _plif_fused_kernel(tau_ref, dv_ref, v_in_ref, spike_ref, v_out_ref,
                       *, v_threshold, v_reset):
    """Fused T-timestep PLIF update.

    The membrane potential is carried in the resident v_out block (its index_map
    is constant over t, so Pallas keeps it in VMEM for the whole t sweep).
    """
    t = pl.program_id(1)

    @pl.when(t == 0)
    def _():
        v_out_ref[...] = v_in_ref[...]

    tau = tau_ref[0, 0]
    dv = dv_ref[0]                            # (tile_rows, lanes)
    v = v_out_ref[...]

    v_new = v + (dv - (v - v_reset)) * tau
    fired = v_new >= v_threshold
    spike_ref[0] = fired.astype(spike_ref.dtype)
    v_out_ref[...] = jnp.where(fired, v_reset, v_new)


# ---------------------------------------------------------------------------
# Tiling / padding helpers
# ---------------------------------------------------------------------------

def _choose_tiling(total, lanes, max_tile_rows, min_grid):
    """Pick (rows, tile_rows) for a flattened array of `total` elements.

    rows is only sublane-aligned (8); the grid uses pl.cdiv(rows, tile_rows) and
    Pallas handles a partial final block, so there is no tile-grid over-padding.
    tile_rows is a multiple of 32 whenever the grid has > 1 step (safe tiling for
    f32 / bf16 / int8 outputs).  When possible the tile is capped so the parallel
    spatial axis has >= min_grid steps (v7x has 2 TensorCores per chip).
    """
    assert lanes % 128 == 0, "lanes must be a multiple of 128"
    assert max_tile_rows % _TILE_ROW_ALIGN == 0, "max_tile_rows must be a multiple of 32"
    rows = -(-total // lanes)                           # ceil division
    rows = -(-rows // _SUBLANE) * _SUBLANE              # sublane-align only
    if rows <= max_tile_rows:
        tile_rows = rows                                # single full-array block
        if min_grid > 1 and rows >= min_grid * _TILE_ROW_ALIGN:
            per_step = -(-rows // min_grid)
            tile_rows = -(-per_step // _TILE_ROW_ALIGN) * _TILE_ROW_ALIGN
    else:
        tile_rows = max_tile_rows
    return rows, tile_rows


def _pad_tail(flat, padded_total):
    """Pad the trailing axis to padded_total; no-op (no copy) if already sized."""
    total = flat.shape[-1]
    if padded_total == total:
        return flat
    pad = [(0, 0)] * (flat.ndim - 1) + [(0, padded_total - total)]
    return jnp.pad(flat, pad)


def _unflatten(y, total, padded_total, spatial_shape):
    """Undo the (rows, lanes) layout; skip the truncating slice if no padding."""
    lead = y.shape[:-2]
    y = y.reshape(lead + (-1,))
    if padded_total != total:
        y = y[..., :total]
    return y.reshape(lead + tuple(spatial_shape))


# ---------------------------------------------------------------------------
# Single-timestep wrapper
# ---------------------------------------------------------------------------

def plif_forward(dv, v, tau, *, v_threshold=1.0, v_reset=0.0,
                 spike_dtype=jnp.bfloat16, lanes=512, max_tile_rows=1024,
                 min_grid=2):
    """One PLIFNode.forward step.

    Args:
      dv:  input voltage increment (any shape, e.g. NCHW), float32.
      v:   current membrane potential, same shape as dv.
      tau: scalar learnable parameter (the module stores 1/init_tau).
      spike_dtype: output dtype of the spike tensor (0/1 exactly representable;
        bf16 default halves spike HBM write bytes and feeds the next layer's MXU).
    Returns:
      (spike, v_updated); spike has spike_dtype, v_updated has dv's dtype/shape.
    """
    orig_shape = dv.shape
    total = int(dv.size)
    rows, tile_rows = _choose_tiling(total, lanes, max_tile_rows, min_grid)
    padded = rows * lanes
    grid = pl.cdiv(rows, tile_rows)

    dv2 = _pad_tail(dv.reshape(-1), padded).reshape(rows, lanes)
    v2 = _pad_tail(v.reshape(-1), padded).reshape(rows, lanes)
    tau2 = jnp.asarray(tau, dtype=dv.dtype).reshape(1, 1)

    kernel = functools.partial(
        _plif_kernel, v_threshold=float(v_threshold), v_reset=float(v_reset)
    )

    spike, v_out = pl.pallas_call(
        kernel,
        out_shape=(
            jax.ShapeDtypeStruct((rows, lanes), spike_dtype),
            jax.ShapeDtypeStruct((rows, lanes), dv.dtype),
        ),
        grid=(grid,),
        in_specs=[
            pl.BlockSpec(memory_space=pltpu.MemorySpace.SMEM),      # tau (scalar)
            pl.BlockSpec((tile_rows, lanes), lambda i: (i, 0)),     # dv tile
            pl.BlockSpec((tile_rows, lanes), lambda i: (i, 0)),     # v tile
        ],
        out_specs=(
            pl.BlockSpec((tile_rows, lanes), lambda i: (i, 0)),     # spike tile
            pl.BlockSpec((tile_rows, lanes), lambda i: (i, 0)),     # v_new tile
        ),
        input_output_aliases={2: 1},      # v input buffer aliases v_out output
        compiler_params=pltpu.CompilerParams(
            dimension_semantics=("parallel",),
            vmem_limit_bytes=_VMEM_LIMIT,
        ),
    )(tau2, dv2, v2)

    spike = _unflatten(spike, total, padded, orig_shape)
    v_out = _unflatten(v_out, total, padded, orig_shape)
    return spike, v_out


# ---------------------------------------------------------------------------
# Fused multi-timestep wrapper (v stays resident in VMEM across T steps).
# This is the fast path for SNN time loops: per-timestep HBM traffic drops from
# ~16 B/elem (looped single step) to ~(dv + spike) bytes.
# ---------------------------------------------------------------------------

def plif_forward_sequence(dv_seq, v, tau, *, v_threshold=1.0, v_reset=0.0,
                          spike_dtype=jnp.bfloat16, lanes=512, max_tile_rows=1024,
                          min_grid=2):
    """Run T PLIF timesteps in one kernel.

    Args:
      dv_seq: (T, *spatial) voltage increments.
      v:      (*spatial) initial membrane potential.
      tau:    scalar learnable parameter.
    Returns:
      (spikes, v_final) with shapes (T, *spatial) and (*spatial).
    """
    T = int(dv_seq.shape[0])
    spatial_shape = dv_seq.shape[1:]
    total = int(v.size)
    rows, tile_rows = _choose_tiling(total, lanes, max_tile_rows, min_grid)
    padded = rows * lanes
    grid = pl.cdiv(rows, tile_rows)

    dv3 = _pad_tail(dv_seq.reshape(T, -1), padded).reshape(T, rows, lanes)
    v2 = _pad_tail(v.reshape(-1), padded).reshape(rows, lanes)
    tau2 = jnp.asarray(tau, dtype=dv_seq.dtype).reshape(1, 1)

    kernel = functools.partial(
        _plif_fused_kernel, v_threshold=float(v_threshold), v_reset=float(v_reset)
    )

    spikes, v_out = pl.pallas_call(
        kernel,
        out_shape=(
            jax.ShapeDtypeStruct((T, rows, lanes), spike_dtype),
            jax.ShapeDtypeStruct((rows, lanes), dv_seq.dtype),
        ),
        grid=(grid, T),
        in_specs=[
            pl.BlockSpec(memory_space=pltpu.MemorySpace.SMEM),                  # tau
            pl.BlockSpec((1, tile_rows, lanes), lambda i, t: (t, i, 0)),        # dv[t]
            pl.BlockSpec((tile_rows, lanes), lambda i, t: (i, 0)),              # v0
        ],
        out_specs=(
            pl.BlockSpec((1, tile_rows, lanes), lambda i, t: (t, i, 0)),        # spike[t]
            pl.BlockSpec((tile_rows, lanes), lambda i, t: (i, 0)),              # v carry/final
        ),
        input_output_aliases={2: 1},       # v0 buffer aliases v_final output
        compiler_params=pltpu.CompilerParams(
            dimension_semantics=("parallel", "arbitrary"),
            vmem_limit_bytes=_VMEM_LIMIT,
        ),
    )(tau2, dv3, v2)

    spikes = _unflatten(spikes, total, padded, spatial_shape)
    v_out = _unflatten(v_out, total, padded, spatial_shape)
    return spikes, v_out


# ---------------------------------------------------------------------------
# Plain-JAX reference
# ---------------------------------------------------------------------------

def _plif_reference(dv, v, tau, v_threshold=1.0, v_reset=0.0):
    v_new = v + (dv - (v - v_reset)) * tau
    spike = (v_new >= v_threshold).astype(dv.dtype)
    v_after = spike * v_reset + (1.0 - spike) * v_new
    return spike, v_after


if __name__ == "__main__":
    # Deterministic parameter init per PLIFNode.__init__: tau = 1 / init_tau
    init_tau = 2.0
    tau = jnp.float32(1.0 / init_tau)
    v_threshold = 1.0
    v_reset = 0.0

    key = jax.random.PRNGKey(0)
    k0, k1, k2, k3, k4, k5, k6 = jax.random.split(key, 7)

    def f32(x):
        return jnp.asarray(x, jnp.float32)

    # --- test 1: single step + state carry, NCHW small shape ------------------
    dv = 2.0 * jax.random.normal(k0, (2, 4, 16, 16), dtype=jnp.float32)
    v0 = jnp.full(dv.shape, v_reset, dtype=jnp.float32)   # module starts at v_reset

    spike, v1 = plif_forward(dv, v0, tau, v_threshold=v_threshold, v_reset=v_reset)
    jax.block_until_ready((spike, v1))
    spike_ref, v1_ref = _plif_reference(dv, v0, tau, v_threshold, v_reset)
    assert jnp.allclose(f32(spike), spike_ref, atol=1e-6), "spike mismatch (step 1)"
    assert jnp.allclose(v1, v1_ref, atol=1e-6), "membrane mismatch (step 1)"

    dv2 = 2.0 * jax.random.normal(k1, dv.shape, dtype=jnp.float32)
    spike2, v2 = plif_forward(dv2, v1, tau, v_threshold=v_threshold, v_reset=v_reset)
    jax.block_until_ready((spike2, v2))
    spike2_ref, v2_ref = _plif_reference(dv2, v1_ref, tau, v_threshold, v_reset)
    assert jnp.allclose(f32(spike2), spike2_ref, atol=1e-6), "spike mismatch (step 2)"
    assert jnp.allclose(v2, v2_ref, atol=1e-6), "membrane mismatch (step 2)"

    # --- test 2: defaults, medium shape -> megacore split (grid=2, partial block)
    dv_m = 2.0 * jax.random.normal(k2, (2, 4, 64, 80), dtype=jnp.float32)
    v_m = 0.5 * jax.random.normal(k3, dv_m.shape, dtype=jnp.float32)
    s_m, vo_m = plif_forward(dv_m, v_m, tau, v_threshold=v_threshold, v_reset=v_reset)
    jax.block_until_ready((s_m, vo_m))
    s_m_ref, vo_m_ref = _plif_reference(dv_m, v_m, tau, v_threshold, v_reset)
    assert jnp.allclose(f32(s_m), s_m_ref, atol=1e-6), "spike mismatch (split grid)"
    assert jnp.allclose(vo_m, vo_m_ref, atol=1e-6), "membrane mismatch (split grid)"

    # --- test 3: odd shape + small tiles -> padding + multi-tile partial block
    dv_odd = 2.0 * jax.random.normal(k4, (4, 8, 24, 25), dtype=jnp.float32)
    v_odd = 0.5 * jax.random.normal(k5, dv_odd.shape, dtype=jnp.float32)
    s_odd, vo = plif_forward(dv_odd, v_odd, tau, v_threshold=v_threshold,
                             v_reset=v_reset, lanes=128, max_tile_rows=32)
    jax.block_until_ready((s_odd, vo))
    s_odd_ref, vo_ref = _plif_reference(dv_odd, v_odd, tau, v_threshold, v_reset)
    assert jnp.allclose(f32(s_odd), s_odd_ref, atol=1e-6), "spike mismatch (odd shape)"
    assert jnp.allclose(vo, vo_ref, atol=1e-6), "membrane mismatch (odd shape)"

    # --- test 4: fused multi-timestep kernel (T steps, v stays in VMEM) -------
    T = 4
    dv_seq = 2.0 * jax.random.normal(k6, (T,) + dv.shape, dtype=jnp.float32)
    spikes_seq, v_final = plif_forward_sequence(
        dv_seq, v0, tau, v_threshold=v_threshold, v_reset=v_reset)
    jax.block_until_ready((spikes_seq, v_final))

    v_r = v0
    spikes_r = []
    for t in range(T):
        s_r, v_r = _plif_reference(dv_seq[t], v_r, tau, v_threshold, v_reset)
        spikes_r.append(s_r)
    spikes_r = jnp.stack(spikes_r, axis=0)
    assert jnp.allclose(f32(spikes_seq), spikes_r, atol=1e-5), "spike mismatch (fused T)"
    assert jnp.allclose(v_final, v_r, atol=1e-5), "membrane mismatch (fused T)"

    # --- test 5: fused kernel with multi-tile grid + padding -------------------
    T2 = 3
    dv_seq2 = 2.0 * jax.random.normal(k6, (T2,) + dv_odd.shape, dtype=jnp.float32)
    v_init2 = 0.5 * jax.random.normal(k5, dv_odd.shape, dtype=jnp.float32)
    spikes2, v_final2 = plif_forward_sequence(
        dv_seq2, v_init2, tau, v_threshold=v_threshold, v_reset=v_reset,
        lanes=128, max_tile_rows=32)
    jax.block_until_ready((spikes2, v_final2))

    v_r2 = v_init2
    spikes_r2 = []
    for t in range(T2):
        s_r, v_r2 = _plif_reference(dv_seq2[t], v_r2, tau, v_threshold, v_reset)
        spikes_r2.append(s_r)
    spikes_r2 = jnp.stack(spikes_r2, axis=0)
    assert jnp.allclose(f32(spikes2), spikes_r2, atol=1e-5), "spike mismatch (fused tiled)"
    assert jnp.allclose(v_final2, v_r2, atol=1e-5), "membrane mismatch (fused tiled)"

    print("KERNEL_OK")
</pallas_src>

<mosaic_0001>
module attributes {stable_mosaic.version = 11 : i64} {
  func.func @_plif_kernel(%arg0: i32, %arg1: memref<1x1xf32, #tpu.memory_space<smem>>, %arg2: memref<8x512xf32, #tpu.memory_space<vmem>>, %arg3: memref<8x512xf32, #tpu.memory_space<vmem>>, %arg4: memref<8x512xbf16, #tpu.memory_space<vmem>>, %arg5: memref<8x512xf32, #tpu.memory_space<vmem>>) attributes {dimension_semantics = [#tpu.dimension_semantics<parallel>], iteration_bounds = array<i64: 1>, scalar_prefetch = 0 : i64, scratch_operands = 0 : i64, tpu.core_type = #tpu.core_type<tc>, window_params = [{transform_indices = @transform_0, window_bounds = array<i64: 1, 1>}, {transform_indices = @transform_1, window_bounds = array<i64: 8, 512>}, {transform_indices = @transform_2, window_bounds = array<i64: 8, 512>}, {transform_indices = @transform_3, window_bounds = array<i64: 8, 512>}, {transform_indices = @transform_4, window_bounds = array<i64: 8, 512>}]} {
    %c0 = arith.constant 0 : index
    %c0_0 = arith.constant 0 : index
    %0 = memref.load %arg1[%c0, %c0_0] : memref<1x1xf32, #tpu.memory_space<smem>>
    %c0_1 = arith.constant 0 : index
    %c0_2 = arith.constant 0 : index
    %1 = vector.load %arg2[%c0_1, %c0_2] : memref<8x512xf32, #tpu.memory_space<vmem>>, vector<8x512xf32>
    %c0_3 = arith.constant 0 : index
    %c0_4 = arith.constant 0 : index
    %2 = vector.load %arg3[%c0_3, %c0_4] : memref<8x512xf32, #tpu.memory_space<vmem>>, vector<8x512xf32>
    %cst = arith.constant 0.000000e+00 : f32
    %3 = vector.broadcast %cst : f32 to vector<8x512xf32>
    %4 = arith.subf %2, %3 : vector<8x512xf32>
    %5 = arith.subf %1, %4 : vector<8x512xf32>
    %6 = vector.broadcast %0 : f32 to vector<8x512xf32>
    %7 = arith.mulf %5, %6 : vector<8x512xf32>
    %8 = arith.addf %2, %7 : vector<8x512xf32>
    %cst_5 = arith.constant 1.000000e+00 : f32
    %9 = vector.broadcast %cst_5 : f32 to vector<8x512xf32>
    %10 = arith.cmpf oge, %8, %9 : vector<8x512xf32>
    %11 = arith.extui %10 : vector<8x512xi1> to vector<8x512xi32>
    %12 = arith.sitofp %11 : vector<8x512xi32> to vector<8x512xf32>
    %13 = arith.truncf %12 : vector<8x512xf32> to vector<8x512xbf16>
    %c0_6 = arith.constant 0 : index
    %c0_7 = arith.constant 0 : index
    %14 = vector.load %arg4[%c0_6, %c0_7] : memref<8x512xbf16, #tpu.memory_space<vmem>>, vector<8x512xbf16>
    tpu.vector_store %arg4[%c0_6, %c0_7], %13 {strides = array<i32>} : memref<8x512xbf16, #tpu.memory_space<vmem>>, vector<8x512xbf16>,
    %cst_8 = arith.constant 0.000000e+00 : f32
    %15 = vector.broadcast %cst_8 : f32 to vector<8x512xf32>
    %16 = arith.select %10, %15, %8 : vector<8x512xi1>, vector<8x512xf32>
    %c0_9 = arith.constant 0 : index
    %c0_10 = arith.constant 0 : index
    %17 = vector.load %arg5[%c0_9, %c0_10] : memref<8x512xf32, #tpu.memory_space<vmem>>, vector<8x512xf32>
    tpu.vector_store %arg5[%c0_9, %c0_10], %16 {strides = array<i32>} : memref<8x512xf32, #tpu.memory_space<vmem>>, vector<8x512xf32>,
    return
  }
  func.func @transform_0(%arg0: i32) -> (i32, i32) {
    %c0_i32 = arith.constant 0 : i32
    %c0_i32_0 = arith.constant 0 : i32
    %c0_i32_1 = arith.constant 0 : i32
    return %c0_i32, %c0_i32_0 : i32, i32
  }
  func.func @transform_1(%arg0: i32) -> (i32, i32) {
    %c0_i32 = arith.constant 0 : i32
    %c0_i32_0 = arith.constant 0 : i32
    return %arg0, %c0_i32 : i32, i32
  }
  func.func @transform_2(%arg0: i32) -> (i32, i32) {
    %c0_i32 = arith.constant 0 : i32
    %c0_i32_0 = arith.constant 0 : i32
    return %arg0, %c0_i32 : i32, i32
  }
  func.func @transform_3(%arg0: i32) -> (i32, i32) {
    %c0_i32 = arith.constant 0 : i32
    %c0_i32_0 = arith.constant 0 : i32
    return %arg0, %c0_i32 : i32, i32
  }
  func.func @transform_4(%arg0: i32) -> (i32, i32) {
    %c0_i32 = arith.constant 0 : i32
    %c0_i32_0 = arith.constant 0 : i32
    return %arg0, %c0_i32 : i32, i32
  }
}

</mosaic_0001>

<llo_original>
// kernel: tpu_custom_call.1
$region0: #{tpu_custom_call.1}
  #allocation0 [shape = 'u32[]', space=smem, size = 0x4, offset = 0x4, fixed_abs, tag = 'smem constant byte address 0x4 - core index']
  #allocation1 [shape = 'u32[72,128]{1,0:T(1,128)}', space=vmem, size = 0x9000, scoped, tag = 'internal scratch']
  #allocation2 [shape = 'f32[1,1]{1,0:T(1,128)S(6)}', space=smem, size = 0x200, scoped, tag = 'scoped memory for tpu_custom_call.1']
  %s0 = inlined_call_operand.<no memory space> [shape: f32[1,1], index: 0, kind: input, shape index: {}]
  %s1 = inlined_call_operand.vmem [shape: f32[8,512], index: 1, kind: input, shape index: {}]
  %s2 = inlined_call_operand.hbm [shape: f32[8,512], index: 2, kind: input, shape index: {}, may-alias: {2,4}]
  %s3 = inlined_call_operand.hbm [shape: bf16[8,512], index: 3, kind: output, shape index: {0}]
  %s4 = inlined_call_operand.hbm [shape: f32[8,512], index: 4, kind: output, shape index: {1}, may-alias: {2,4}]
  %5 = xla_tuple %s3, %s4
  %s6 = sld [smem:[#allocation0]]
  $region34: #{tpu_custom_call.1} parent=0
    _
  %s8 = ssub.s32 1, %s6
  %s9 = scalar_select 0, %s8, %s6
  %10 = sst [smem:[#allocation2]] %s0
  $region1: #{tpu_custom_call.1} parent=0
    #allocation3 [shape = 'u8[16384]{0}', space=vmem, size = 0x4000, scoped, tag = 'input window, operand 2, single buffered']
    #allocation4 [shape = 's32[1]{0}', space=sflag, size = 0x4, scoped, tag = 'scoped memory for tpu_custom_call.1']
    #allocation5 [shape = 's32[1]{0}', space=sflag, size = 0x4, scoped, tag = 'scoped memory for tpu_custom_call.1']
    #allocation6 [shape = 'u8[8192]{0}', space=vmem, size = 0x2000, scoped, tag = 'output window, operand 0, single buffered']
    #allocation7 [shape = 'u8[16384]{0}', space=vmem, size = 0x4000, scoped, tag = 'output window, operand 1, single buffered']
    #allocation8 [shape = 's32[1]{0}', space=sflag, size = 0x4, scoped, tag = 'scoped memory for tpu_custom_call.1']
    %11 = vsyncpa [#allocation4], 0
    %12 = vsyncpa [#allocation5], 0
    %13 = vsyncpa [#allocation8], 0
    // Predicated region
    $region2: #{tpu_custom_call.1} parent=1 // pred_check
      _
    $region3: #{tpu_custom_call.1} parent=1 // pred_check_branch
      %15 = sbr.rel (0) target = $region5
    $region4: #{tpu_custom_call.1} parent=1 // pred_region
      _
    $region5: #{tpu_custom_call.1} parent=1 // pred_fallthru
      _
    // Predicated region
    $region6: #{tpu_custom_call.1} parent=1 // pred_check
      _
    $region7: #{tpu_custom_call.1} parent=1 // pred_check_branch
      %17 = sbr.rel (0) target = $region9
    $region8: #{tpu_custom_call.1} parent=1 // pred_region
      _
    $region9: #{tpu_custom_call.1} parent=1 // pred_fallthru
      _
    // Predicated region
    $region10: #{tpu_custom_call.1} parent=1 // pred_check
      _
    $region11: #{tpu_custom_call.1} parent=1 // pred_check_branch
      %19 = sbr.rel (0) target = $region13
    $region12: #{tpu_custom_call.1} parent=1 // pred_region
      %21 = vsyncadd [#allocation4], 0
      %s23 = sshll.u32 %s2, 4
      %s24 = int_to_ptr.hbm [resolvable:$true] %s23
      %s25 = sshll.u32 [#allocation3], 4
      %s26 = int_to_ptr.vmem [resolvable:$true] %s25
      %28 = dma.hbm_to_vmem [thread:$0]  %s24, 512, %s26, [#allocation4]
    $region13: #{tpu_custom_call.1} parent=1 // pred_fallthru
      _
    // Predicated region
    $region14: #{tpu_custom_call.1} parent=1 // pred_check
      _
    $region15: #{tpu_custom_call.1} parent=1 // pred_check_branch
      %30 = sbr.rel (0) target = $region17
    $region16: #{tpu_custom_call.1} parent=1 // pred_region
      %32 = dma.done [#allocation4], 512
    $region17: #{tpu_custom_call.1} parent=1 // pred_fallthru
      _
    %s33 = sld [smem:[#allocation2]]
    %v34 = vld [vmem:[%s1] sm:$0xff]
    %v35 = vld [vmem:[%s1 + $0x8] sm:$0xff]
    %v36 = vld [vmem:[%s1 + $0x10] sm:$0xff]
    %v37 = vld [vmem:[%s1 + $0x18] sm:$0xff]
    %v38 = vld [vmem:[#allocation3] sm:$0xff]
    %v39 = vld [vmem:[#allocation3 + $0x8] sm:$0xff]
    %v40 = vld [vmem:[#allocation3 + $0x10] sm:$0xff]
    %v41 = vld [vmem:[#allocation3 + $0x18] sm:$0xff]
    %v42 = vsub.f32 %v34, %v38
    %v43 = vsub.f32 %v35, %v39
    %v44 = vsub.f32 %v36, %v40
    %v45 = vsub.f32 %v37, %v41
    %v46 = vstv %s33
    %v47 = vmul.f32 %v42, %v46
    %v48 = vmul.f32 %v43, %v46
    %v49 = vmul.f32 %v44, %v46
    %v50 = vmul.f32 %v45, %v46
    %v51 = vadd.f32 %v38, %v47
    %v52 = vadd.f32 %v39, %v48
    %v53 = vadd.f32 %v40, %v49
    %v54 = vadd.f32 %v41, %v50
    %vm55 = vcmp.ge.f32.partialorder %v51, 1.0
    %vm56 = vcmp.ge.f32.partialorder %v52, 1.0
    %vm57 = vcmp.ge.f32.partialorder %v53, 1.0
    %vm58 = vcmp.ge.f32.partialorder %v54, 1.0
    %v59 = vsel %vm55, 1, 0
    %v60 = vsel %vm56, 1, 0
    %v61 = vsel %vm57, 1, 0
    %v62 = vsel %vm58, 1, 0
    %v63 = vcvt.s32.f32 %v59
    %v64 = vcvt.s32.f32 %v60
    %v65 = vcvt.s32.f32 %v61
    %v66 = vcvt.s32.f32 %v62
    %v67 = vpack.c.bf16 %v64, %v63
    %v68 = vpack.c.bf16 %v66, %v65
    %69 = vst [vmem:[#allocation6] sm:$0xff] %v67
    %70 = vst [vmem:[#allocation6 + $0x8] sm:$0xff] %v68
    %v71 = vsel %vm55, 0.0, %v51
    %v72 = vsel %vm56, 0.0, %v52
    %v73 = vsel %vm57, 0.0, %v53
    %v74 = vsel %vm58, 0.0, %v54
    %75 = vst [vmem:[#allocation7] sm:$0xff] %v71
    %76 = vst [vmem:[#allocation7 + $0x8] sm:$0xff] %v72
    %77 = vst [vmem:[#allocation7 + $0x10] sm:$0xff] %v73
    %78 = vst [vmem:[#allocation7 + $0x18] sm:$0xff] %v74
    // Predicated region
    $region18: #{tpu_custom_call.1} parent=1 // pred_check
      _
    $region19: #{tpu_custom_call.1} parent=1 // pred_check_branch
      %80 = sbr.rel (0) target = $region21
    $region20: #{tpu_custom_call.1} parent=1 // pred_region
      %82 = vsyncadd [#allocation5], 0
      %s84 = sshll.u32 [#allocation6], 4
      %s85 = int_to_ptr.vmem [resolvable:$true] %s84
      %s86 = sshll.u32 %s3, 4
      %s87 = int_to_ptr.hbm [resolvable:$true] %s86
      %89 = dma.vmem_to_hbm [thread:$0]  %s85, 256, %s87, [#allocation5]
    $region21: #{tpu_custom_call.1} parent=1 // pred_fallthru
      _
    // Predicated region
    $region22: #{tpu_custom_call.1} parent=1 // pred_check
      _
    $region23: #{tpu_custom_call.1} parent=1 // pred_check_branch
      %91 = sbr.rel (0) target = $region25
    $region24: #{tpu_custom_call.1} parent=1 // pred_region
      %93 = vsyncadd [#allocation8], 0
      %s95 = sshll.u32 [#allocation7], 4
      %s96 = int_to_ptr.vmem [resolvable:$true] %s95
      %s97 = sshll.u32 %s4, 4
      %s98 = int_to_ptr.hbm [resolvable:$true] %s97
      %100 = dma.vmem_to_hbm [thread:$0]  %s96, 512, %s98, [#allocation8]
    $region25: #{tpu_custom_call.1} parent=1 // pred_fallthru
      _
    // Predicated region
    $region26: #{tpu_custom_call.1} parent=1 // pred_check
      _
    $region27: #{tpu_custom_call.1} parent=1 // pred_check_branch
      %102 = sbr.rel (0) target = $region29
    $region28: #{tpu_custom_call.1} parent=1 // pred_region
      %104 = dma.done [#allocation5], 256
    $region29: #{tpu_custom_call.1} parent=1 // pred_fallthru
      _
    // Predicated region
    $region30: #{tpu_custom_call.1} parent=1 // pred_check
      _
    $region31: #{tpu_custom_call.1} parent=1 // pred_check_branch
      %106 = sbr.rel (0) target = $region33
    $region32: #{tpu_custom_call.1} parent=1 // pred_region
      %108 = dma.done [#allocation8], 512
    $region33: #{tpu_custom_call.1} parent=1 // pred_fallthru
      _
    %109 = vsyncpa [#allocation4], 1
    %110 = vsyncpa [#allocation5], 1
    %111 = vsyncpa [#allocation8], 1

</llo_original>
